<compile_context>
chip_gen: v7x
topology: tpu7x:2x2x1
jax: 0.10.0
libtpu: 0.0.40
codegen_flags: <defaults>
</compile_context>

<pallas_src>
import functools

import jax
import jax.numpy as jnp
from jax.experimental import pallas as pl
from jax.experimental.pallas import tpu as pltpu


def _round_up(x: int, m: int) -> int:
    return ((x + m - 1) // m) * m


def _discriminator_kernel(x_ref, w1_ref, b1_ref, w2_ref, b2_ref, o_ref):
    # Linear(768 -> 384 padded) on the MXU, f32 accumulation.
    h = jnp.dot(x_ref[...], w1_ref[...], preferred_element_type=jnp.float32)
    h = jnp.maximum(h + b1_ref[...], 0.0)                     # bias + ReLU (VPU)
    # Linear(384 -> 128 padded): one clean lane-dense MXU pass.
    out = jnp.dot(h.astype(w2_ref.dtype), w2_ref[...],
                  preferred_element_type=jnp.float32)
    o_ref[...] = (out + b2_ref[...]).astype(o_ref.dtype)


@functools.partial(jax.jit, static_argnames=("block_b", "compute_dtype"))
def discriminator_forward(x, w1, b1, w2, b2, *, block_b=256, compute_dtype=None):
    """y = relu(x @ w1 + b1) @ w2 + b2, with w1:(768,300), b1:(300,), w2:(300,2), b2:(2,)."""
    B, D_in = x.shape
    D_hid = w1.shape[1]
    D_out = w2.shape[1]
    assert w1.shape == (D_in, D_hid)
    assert w2.shape == (D_hid, D_out)

    # Lane-aligned padded dims (multiples of 128).
    D_hid_p = _round_up(D_hid, 128)   # 300 -> 384
    D_out_p = _round_up(D_out, 128)   # 2   -> 128
    assert D_in % 128 == 0, "input feature dim must be lane-aligned (768 is)"

    # Batch tile: at least the sublane granule (8), at most `block_b`.
    TB = min(block_b, max(8, _round_up(B, 8)))
    B_pad = _round_up(B, TB)

    # Zero-pad parameters (zeros contribute nothing to the real logits) and batch.
    w1_p = jnp.pad(w1, ((0, 0), (0, D_hid_p - D_hid)))
    b1_p = jnp.pad(b1.reshape(1, D_hid), ((0, 0), (0, D_hid_p - D_hid)))
    w2_p = jnp.pad(w2, ((0, D_hid_p - D_hid), (0, D_out_p - D_out)))
    b2_p = jnp.pad(b2.reshape(1, D_out), ((0, 0), (0, D_out_p - D_out)))
    x_p = jnp.pad(x, ((0, B_pad - B), (0, 0)))

    if compute_dtype is not None:
        # Optional bf16 matmul inputs (halves W1 HBM traffic); f32 accumulation kept.
        x_p = x_p.astype(compute_dtype)
        w1_p = w1_p.astype(compute_dtype)
        w2_p = w2_p.astype(compute_dtype)

    out_padded = pl.pallas_call(
        _discriminator_kernel,
        out_shape=jax.ShapeDtypeStruct((B_pad, D_out_p), jnp.float32),
        grid_spec=pltpu.PrefetchScalarGridSpec(
            num_scalar_prefetch=0,
            grid=(B_pad // TB,),
            in_specs=[
                # Activations tiled over batch (pipelined, double-buffered).
                pl.BlockSpec((TB, D_in), lambda i: (i, 0)),
                # Weights / biases: same block every step -> VMEM-resident.
                pl.BlockSpec((D_in, D_hid_p), lambda i: (0, 0)),
                pl.BlockSpec((1, D_hid_p), lambda i: (0, 0)),
                pl.BlockSpec((D_hid_p, D_out_p), lambda i: (0, 0)),
                pl.BlockSpec((1, D_out_p), lambda i: (0, 0)),
            ],
            out_specs=pl.BlockSpec((TB, D_out_p), lambda i: (i, 0)),
        ),
        compiler_params=pltpu.CompilerParams(
            dimension_semantics=("parallel",),
            vmem_limit_bytes=32 * 1024 * 1024,  # safe on v7x's 64 MiB VMEM too
        ),
    )(x_p, w1_p, b1_p, w2_p, b2_p)

    # Strip batch padding and the padded logit lanes.
    return out_padded[:B, :D_out].astype(x.dtype)


def init_params(key, d_in=768, d_hid=300, d_out=2, dtype=jnp.float32):
    """Deterministic init mimicking nn.Linear's uniform(-1/sqrt(fan_in), 1/sqrt(fan_in)).

    Weights are stored as (in, out) so the kernel computes y = x @ W + b, which is
    equivalent to PyTorch's x @ W.T with W of shape (out, in).
    """
    k1, k2, k3, k4 = jax.random.split(key, 4)
    bound1 = 1.0 / jnp.sqrt(d_in)
    bound2 = 1.0 / jnp.sqrt(d_hid)
    w1 = jax.random.uniform(k1, (d_in, d_hid), dtype, -bound1, bound1)
    b1 = jax.random.uniform(k2, (d_hid,), dtype, -bound1, bound1)
    w2 = jax.random.uniform(k3, (d_hid, d_out), dtype, -bound2, bound2)
    b2 = jax.random.uniform(k4, (d_out,), dtype, -bound2, bound2)
    return w1, b1, w2, b2


if __name__ == "__main__":
    key = jax.random.PRNGKey(0)
    kx, kp = jax.random.split(key)

    B = 8  # small batch
    x = jax.random.normal(kx, (B, 768), jnp.float32)
    w1, b1, w2, b2 = init_params(kp)

    out = discriminator_forward(x, w1, b1, w2, b2)
    out = jax.block_until_ready(out)

    # Pure-JAX reference check (f32 path, exact semantics of the PyTorch module).
    ref = jnp.maximum(x @ w1 + b1[None, :], 0.0) @ w2 + b2[None, :]
    assert out.shape == (B, 2)
    assert jnp.allclose(out, ref, atol=1e-4, rtol=1e-4), "mismatch vs reference"

    print("KERNEL_OK")
</pallas_src>

<mosaic_0001>
module attributes {stable_mosaic.version = 11 : i64} {
  func.func @_discriminator_kernel(%arg0: i32, %arg1: memref<8x768xf32, #tpu.memory_space<vmem>>, %arg2: memref<768x384xf32, #tpu.memory_space<vmem>>, %arg3: memref<1x384xf32, #tpu.memory_space<vmem>>, %arg4: memref<384x128xf32, #tpu.memory_space<vmem>>, %arg5: memref<1x128xf32, #tpu.memory_space<vmem>>, %arg6: memref<8x128xf32, #tpu.memory_space<vmem>>) attributes {dimension_semantics = [#tpu.dimension_semantics<parallel>], iteration_bounds = array<i64: 1>, scalar_prefetch = 0 : i64, scratch_operands = 0 : i64, tpu.core_type = #tpu.core_type<tc>, window_params = [{transform_indices = @transform_0, window_bounds = array<i64: 8, 768>}, {pipeline_mode = #tpu.pipeline_mode<synchronous>, transform_indices = @transform_1, window_bounds = array<i64: 768, 384>}, {pipeline_mode = #tpu.pipeline_mode<synchronous>, transform_indices = @transform_2, window_bounds = array<i64: 1, 384>}, {pipeline_mode = #tpu.pipeline_mode<synchronous>, transform_indices = @transform_3, window_bounds = array<i64: 384, 128>}, {pipeline_mode = #tpu.pipeline_mode<synchronous>, transform_indices = @transform_4, window_bounds = array<i64: 1, 128>}, {transform_indices = @transform_5, window_bounds = array<i64: 8, 128>}]} {
    %c0 = arith.constant 0 : index
    %c0_0 = arith.constant 0 : index
    %0 = vector.load %arg1[%c0, %c0_0] : memref<8x768xf32, #tpu.memory_space<vmem>>, vector<8x768xf32>
    %c0_1 = arith.constant 0 : index
    %c0_2 = arith.constant 0 : index
    %1 = vector.load %arg2[%c0_1, %c0_2] : memref<768x384xf32, #tpu.memory_space<vmem>>, vector<768x384xf32>
    %cst = arith.constant dense<0.000000e+00> : vector<8x384xf32>
    %2 = tpu.matmul %0, %1, %cst {dimension_numbers = #tpu.dot_dimension_numbers<[1], [0], [0], [1], [0, 0, 1, 1], [], []>} : vector<8x768xf32>, vector<768x384xf32>, vector<8x384xf32> -> vector<8x384xf32>
    %c0_3 = arith.constant 0 : index
    %c0_4 = arith.constant 0 : index
    %3 = vector.load %arg3[%c0_3, %c0_4] : memref<1x384xf32, #tpu.memory_space<vmem>>, vector<1x384xf32>
    %4 = vector.broadcast %3 : vector<1x384xf32> to vector<8x384xf32>
    %5 = arith.addf %2, %4 : vector<8x384xf32>
    %cst_5 = arith.constant 0.000000e+00 : f32
    %6 = vector.broadcast %cst_5 : f32 to vector<8x384xf32>
    %7 = arith.maximumf %5, %6 : vector<8x384xf32>
    %c0_6 = arith.constant 0 : index
    %c0_7 = arith.constant 0 : index
    %8 = vector.load %arg4[%c0_6, %c0_7] : memref<384x128xf32, #tpu.memory_space<vmem>>, vector<384x128xf32>
    %cst_8 = arith.constant dense<0.000000e+00> : vector<8x128xf32>
    %9 = tpu.matmul %7, %8, %cst_8 {dimension_numbers = #tpu.dot_dimension_numbers<[1], [0], [0], [1], [0, 0, 1, 1], [], []>} : vector<8x384xf32>, vector<384x128xf32>, vector<8x128xf32> -> vector<8x128xf32>
    %c0_9 = arith.constant 0 : index
    %c0_10 = arith.constant 0 : index
    %10 = vector.load %arg5[%c0_9, %c0_10] : memref<1x128xf32, #tpu.memory_space<vmem>>, vector<1x128xf32>
    %11 = vector.broadcast %10 : vector<1x128xf32> to vector<8x128xf32>
    %12 = arith.addf %9, %11 : vector<8x128xf32>
    %c0_11 = arith.constant 0 : index
    %c0_12 = arith.constant 0 : index
    %13 = vector.load %arg6[%c0_11, %c0_12] : memref<8x128xf32, #tpu.memory_space<vmem>>, vector<8x128xf32>
    tpu.vector_store %arg6[%c0_11, %c0_12], %12 {strides = array<i32>} : memref<8x128xf32, #tpu.memory_space<vmem>>, vector<8x128xf32>,
    return
  }
  func.func @transform_0(%arg0: i32) -> (i32, i32) {
    %c0_i32 = arith.constant 0 : i32
    %c0_i32_0 = arith.constant 0 : i32
    return %arg0, %c0_i32 : i32, i32
  }
  func.func @transform_1(%arg0: i32) -> (i32, i32) {
    %c0_i32 = arith.constant 0 : i32
    %c0_i32_0 = arith.constant 0 : i32
    %c0_i32_1 = arith.constant 0 : i32
    return %c0_i32, %c0_i32_0 : i32, i32
  }
  func.func @transform_2(%arg0: i32) -> (i32, i32) {
    %c0_i32 = arith.constant 0 : i32
    %c0_i32_0 = arith.constant 0 : i32
    %c0_i32_1 = arith.constant 0 : i32
    return %c0_i32, %c0_i32_0 : i32, i32
  }
  func.func @transform_3(%arg0: i32) -> (i32, i32) {
    %c0_i32 = arith.constant 0 : i32
    %c0_i32_0 = arith.constant 0 : i32
    %c0_i32_1 = arith.constant 0 : i32
    return %c0_i32, %c0_i32_0 : i32, i32
  }
  func.func @transform_4(%arg0: i32) -> (i32, i32) {
    %c0_i32 = arith.constant 0 : i32
    %c0_i32_0 = arith.constant 0 : i32
    %c0_i32_1 = arith.constant 0 : i32
    return %c0_i32, %c0_i32_0 : i32, i32
  }
  func.func @transform_5(%arg0: i32) -> (i32, i32) {
    %c0_i32 = arith.constant 0 : i32
    %c0_i32_0 = arith.constant 0 : i32
    return %arg0, %c0_i32 : i32, i32
  }
}

</mosaic_0001>

<llo_original>
// kernel: discriminator_forward.1
$region0: #{discriminator_forward.1}
  #allocation0 [shape = 'u32[]', space=smem, size = 0x4, offset = 0x4, fixed_abs, tag = 'smem constant byte address 0x4 - core index']
  #allocation1 [shape = 'u32[144,128]{1,0:T(1,128)}', space=vmem, size = 0x12000, scoped, tag = 'internal scratch']
  %s0 = inlined_call_operand.vmem [shape: f32[8,768], index: 0, kind: input, shape index: {}]
  %s1 = inlined_call_operand.vmem [shape: f32[768,384], index: 1, kind: input, shape index: {}]
  %s2 = inlined_call_operand.vmem [shape: f32[1,384], index: 2, kind: input, shape index: {}]
  %s3 = inlined_call_operand.vmem [shape: f32[384,128], index: 3, kind: input, shape index: {}]
  %s4 = inlined_call_operand.vmem [shape: f32[1,128], index: 4, kind: input, shape index: {}]
  %s5 = inlined_call_operand.vmem [shape: f32[8,128], index: 5, kind: output, shape index: {}]
  %s6 = sld [smem:[#allocation0]]
  $region30: #{discriminator_forward.1} parent=0
    _
  %s8 = ssub.s32 1, %s6
  %s9 = scalar_select 0, %s8, %s6
  // Predicated region
  $region2: #{discriminator_forward.1} parent=0 // pred_check
    _
  $region3: #{discriminator_forward.1} parent=0 // pred_check_branch
    %11 = sbr.rel (0) target = $region5
  $region4: #{discriminator_forward.1} parent=0 // pred_region
    _
  $region5: #{discriminator_forward.1} parent=0 // pred_fallthru
    _
  // Predicated region
  $region6: #{discriminator_forward.1} parent=0 // pred_check
    _
  $region7: #{discriminator_forward.1} parent=0 // pred_check_branch
    %13 = sbr.rel (0) target = $region9
  $region8: #{discriminator_forward.1} parent=0 // pred_region
    _
  $region9: #{discriminator_forward.1} parent=0 // pred_fallthru
    _
  // Predicated region
  $region10: #{discriminator_forward.1} parent=0 // pred_check
    _
  $region11: #{discriminator_forward.1} parent=0 // pred_check_branch
    %15 = sbr.rel (0) target = $region13
  $region12: #{discriminator_forward.1} parent=0 // pred_region
    _
  $region13: #{discriminator_forward.1} parent=0 // pred_fallthru
    _
  // Predicated region
  $region14: #{discriminator_forward.1} parent=0 // pred_check
    _
  $region15: #{discriminator_forward.1} parent=0 // pred_check_branch
    %17 = sbr.rel (0) target = $region17
  $region16: #{discriminator_forward.1} parent=0 // pred_region
    _
  $region17: #{discriminator_forward.1} parent=0 // pred_fallthru
    _
  // Predicated region
  $region18: #{discriminator_forward.1} parent=0 // pred_check
    _
  $region19: #{discriminator_forward.1} parent=0 // pred_check_branch
    %19 = sbr.rel (0) target = $region21
  $region20: #{discriminator_forward.1} parent=0 // pred_region
    _
  $region21: #{discriminator_forward.1} parent=0 // pred_fallthru
    _
  %v20 = vld [vmem:[%s0] sm:$0xff]
  %v21 = vld [vmem:[%s0 + $0x8] sm:$0xff]
  %v22 = vld [vmem:[%s0 + $0x10] sm:$0xff]
  %v23 = vld [vmem:[%s0 + $0x18] sm:$0xff]
  %v24 = vld [vmem:[%s0 + $0x20] sm:$0xff]
  %v25 = vld [vmem:[%s0 + $0x28] sm:$0xff]
  %v26 = vld [vmem:[%s1] sm:$0xff]
  %v27 = vld [vmem:[%s1 + $0x8] sm:$0xff]
  %v28 = vld [vmem:[%s1 + $0x10] sm:$0xff]
  %v29 = vld [vmem:[%s1 + $0x18] sm:$0xff]
  %v30 = vld [vmem:[%s1 + $0x20] sm:$0xff]
  %v31 = vld [vmem:[%s1 + $0x28] sm:$0xff]
  %v32 = vld [vmem:[%s1 + $0x30] sm:$0xff]
  %v33 = vld [vmem:[%s1 + $0x38] sm:$0xff]
  %v34 = vld [vmem:[%s1 + $0x40] sm:$0xff]
  %v35 = vld [vmem:[%s1 + $0x48] sm:$0xff]
  %v36 = vld [vmem:[%s1 + $0x50] sm:$0xff]
  %v37 = vld [vmem:[%s1 + $0x58] sm:$0xff]
  %v38 = vld [vmem:[%s1 + $0x60] sm:$0xff]
  %v39 = vld [vmem:[%s1 + $0x68] sm:$0xff]
  %v40 = vld [vmem:[%s1 + $0x70] sm:$0xff]
  %v41 = vld [vmem:[%s1 + $0x78] sm:$0xff]
  %v42 = vld [vmem:[%s1 + $0x80] sm:$0xff]
  %v43 = vld [vmem:[%s1 + $0x88] sm:$0xff]
  %v44 = vld [vmem:[%s1 + $0x90] sm:$0xff]
  %v45 = vld [vmem:[%s1 + $0x98] sm:$0xff]
  %v46 = vld [vmem:[%s1 + $0xa0] sm:$0xff]
  %v47 = vld [vmem:[%s1 + $0xa8] sm:$0xff]
  %v48 = vld [vmem:[%s1 + $0xb0] sm:$0xff]
  %v49 = vld [vmem:[%s1 + $0xb8] sm:$0xff]
  %v50 = vld [vmem:[%s1 + $0xc0] sm:$0xff]
  %v51 = vld [vmem:[%s1 + $0xc8] sm:$0xff]
  %v52 = vld [vmem:[%s1 + $0xd0] sm:$0xff]
  %v53 = vld [vmem:[%s1 + $0xd8] sm:$0xff]
  %v54 = vld [vmem:[%s1 + $0xe0] sm:$0xff]
  %v55 = vld [vmem:[%s1 + $0xe8] sm:$0xff]
  %v56 = vld [vmem:[%s1 + $0xf0] sm:$0xff]
  %v57 = vld [vmem:[%s1 + $0xf8] sm:$0xff]
  %v58 = vld [vmem:[%s1 + $0x100] sm:$0xff]
  %v59 = vld [vmem:[%s1 + $0x108] sm:$0xff]
  %v60 = vld [vmem:[%s1 + $0x110] sm:$0xff]
  %v61 = vld [vmem:[%s1 + $0x118] sm:$0xff]
  %v62 = vld [vmem:[%s1 + $0x120] sm:$0xff]
  %v63 = vld [vmem:[%s1 + $0x128] sm:$0xff]
  %v64 = vld [vmem:[%s1 + $0x130] sm:$0xff]
  %v65 = vld [vmem:[%s1 + $0x138] sm:$0xff]
  %v66 = vld [vmem:[%s1 + $0x140] sm:$0xff]
  %v67 = vld [vmem:[%s1 + $0x148] sm:$0xff]
  %v68 = vld [vmem:[%s1 + $0x150] sm:$0xff]
  %v69 = vld [vmem:[%s1 + $0x158] sm:$0xff]
  %v70 = vld [vmem:[%s1 + $0x160] sm:$0xff]
  %v71 = vld [vmem:[%s1 + $0x168] sm:$0xff]
  %v72 = vld [vmem:[%s1 + $0x170] sm:$0xff]
  %v73 = vld [vmem:[%s1 + $0x178] sm:$0xff]
  %v74 = vld [vmem:[%s1 + $0x180] sm:$0xff]
  %v75 = vld [vmem:[%s1 + $0x188] sm:$0xff]
  %v76 = vld [vmem:[%s1 + $0x190] sm:$0xff]
  %v77 = vld [vmem:[%s1 + $0x198] sm:$0xff]
  %v78 = vld [vmem:[%s1 + $0x1a0] sm:$0xff]
  %v79 = vld [vmem:[%s1 + $0x1a8] sm:$0xff]
  %v80 = vld [vmem:[%s1 + $0x1b0] sm:$0xff]
  %v81 = vld [vmem:[%s1 + $0x1b8] sm:$0xff]
  %v82 = vld [vmem:[%s1 + $0x1c0] sm:$0xff]
  %v83 = vld [vmem:[%s1 + $0x1c8] sm:$0xff]
  %v84 = vld [vmem:[%s1 + $0x1d0] sm:$0xff]
  %v85 = vld [vmem:[%s1 + $0x1d8] sm:$0xff]
  %v86 = vld [vmem:[%s1 + $0x1e0] sm:$0xff]
  %v87 = vld [vmem:[%s1 + $0x1e8] sm:$0xff]
  %v88 = vld [vmem:[%s1 + $0x1f0] sm:$0xff]
  %v89 = vld [vmem:[%s1 + $0x1f8] sm:$0xff]
  %v90 = vld [vmem:[%s1 + $0x200] sm:$0xff]
  %v91 = vld [vmem:[%s1 + $0x208] sm:$0xff]
  %v92 = vld [vmem:[%s1 + $0x210] sm:$0xff]
  %v93 = vld [vmem:[%s1 + $0x218] sm:$0xff]
  %v94 = vld [vmem:[%s1 + $0x220] sm:$0xff]
  %v95 = vld [vmem:[%s1 + $0x228] sm:$0xff]
  %v96 = vld [vmem:[%s1 + $0x230] sm:$0xff]
  %v97 = vld [vmem:[%s1 + $0x238] sm:$0xff]
  %v98 = vld [vmem:[%s1 + $0x240] sm:$0xff]
  %v99 = vld [vmem:[%s1 + $0x248] sm:$0xff]
  %v100 = vld [vmem:[%s1 + $0x250] sm:$0xff]
  %v101 = vld [vmem:[%s1 + $0x258] sm:$0xff]
  %v102 = vld [vmem:[%s1 + $0x260] sm:$0xff]
  %v103 = vld [vmem:[%s1 + $0x268] sm:$0xff]
  %v104 = vld [vmem:[%s1 + $0x270] sm:$0xff]
  %v105 = vld [vmem:[%s1 + $0x278] sm:$0xff]
  %v106 = vld [vmem:[%s1 + $0x280] sm:$0xff]
  %v107 = vld [vmem:[%s1 + $0x288] sm:$0xff]
  %v108 = vld [vmem:[%s1 + $0x290] sm:$0xff]
  %v109 = vld [vmem:[%s1 + $0x298] sm:$0xff]
  %v110 = vld [vmem:[%s1 + $0x2a0] sm:$0xff]
  %v111 = vld [vmem:[%s1 + $0x2a8] sm:$0xff]
  %v112 = vld [vmem:[%s1 + $0x2b0] sm:$0xff]
  %v113 = vld [vmem:[%s1 + $0x2b8] sm:$0xff]
  %v114 = vld [vmem:[%s1 + $0x2c0] sm:$0xff]
  %v115 = vld [vmem:[%s1 + $0x2c8] sm:$0xff]
  %v116 = vld [vmem:[%s1 + $0x2d0] sm:$0xff]
  %v117 = vld [vmem:[%s1 + $0x2d8] sm:$0xff]
  %v118 = vld [vmem:[%s1 + $0x2e0] sm:$0xff]
  %v119 = vld [vmem:[%s1 + $0x2e8] sm:$0xff]
  %v120 = vld [vmem:[%s1 + $0x2f0] sm:$0xff]
  %v121 = vld [vmem:[%s1 + $0x2f8] sm:$0xff]
  %v122 = vld [vmem:[%s1 + $0x300] sm:$0xff]
  %v123 = vld [vmem:[%s1 + $0x308] sm:$0xff]
  %v124 = vld [vmem:[%s1 + $0x310] sm:$0xff]
  %v125 = vld [vmem:[%s1 + $0x318] sm:$0xff]
  %v126 = vld [vmem:[%s1 + $0x320] sm:$0xff]
  %v127 = vld [vmem:[%s1 + $0x328] sm:$0xff]
  %v128 = vld [vmem:[%s1 + $0x330] sm:$0xff]
  %v129 = vld [vmem:[%s1 + $0x338] sm:$0xff]
  %v130 = vld [vmem:[%s1 + $0x340] sm:$0xff]
  %v131 = vld [vmem:[%s1 + $0x348] sm:$0xff]
  %v132 = vld [vmem:[%s1 + $0x350] sm:$0xff]
  %v133 = vld [vmem:[%s1 + $0x358] sm:$0xff]
  %v134 = vld [vmem:[%s1 + $0x360] sm:$0xff]
  %v135 = vld [vmem:[%s1 + $0x368] sm:$0xff]
  %v136 = vld [vmem:[%s1 + $0x370] sm:$0xff]
  %v137 = vld [vmem:[%s1 + $0x378] sm:$0xff]
  %v138 = vld [vmem:[%s1 + $0x380] sm:$0xff]
  %v139 = vld [vmem:[%s1 + $0x388] sm:$0xff]
  %v140 = vld [vmem:[%s1 + $0x390] sm:$0xff]
  %v141 = vld [vmem:[%s1 + $0x398] sm:$0xff]
  %v142 = vld [vmem:[%s1 + $0x3a0] sm:$0xff]
  %v143 = vld [vmem:[%s1 + $0x3a8] sm:$0xff]
  %v144 = vld [vmem:[%s1 + $0x3b0] sm:$0xff]
  %v145 = vld [vmem:[%s1 + $0x3b8] sm:$0xff]
  %v146 = vld [vmem:[%s1 + $0x3c0] sm:$0xff]
  %v147 = vld [vmem:[%s1 + $0x3c8] sm:$0xff]
  %v148 = vld [vmem:[%s1 + $0x3d0] sm:$0xff]
  %v149 = vld [vmem:[%s1 + $0x3d8] sm:$0xff]
  %v150 = vld [vmem:[%s1 + $0x3e0] sm:$0xff]
  %v151 = vld [vmem:[%s1 + $0x3e8] sm:$0xff]
  %v152 = vld [vmem:[%s1 + $0x3f0] sm:$0xff]
  %v153 = vld [vmem:[%s1 + $0x3f8] sm:$0xff]
  %v154 = vld [vmem:[%s1 + $0x400] sm:$0xff]
  %v155 = vld [vmem:[%s1 + $0x408] sm:$0xff]
  %v156 = vld [vmem:[%s1 + $0x410] sm:$0xff]
  %v157 = vld [vmem:[%s1 + $0x418] sm:$0xff]
  %v158 = vld [vmem:[%s1 + $0x420] sm:$0xff]
  %v159 = vld [vmem:[%s1 + $0x428] sm:$0xff]
  %v160 = vld [vmem:[%s1 + $0x430] sm:$0xff]
  %v161 = vld [vmem:[%s1 + $0x438] sm:$0xff]
  %v162 = vld [vmem:[%s1 + $0x440] sm:$0xff]
  %v163 = vld [vmem:[%s1 + $0x448] sm:$0xff]
  %v164 = vld [vmem:[%s1 + $0x450] sm:$0xff]
  %v165 = vld [vmem:[%s1 + $0x458] sm:$0xff]
  %v166 = vld [vmem:[%s1 + $0x460] sm:$0xff]
  %v167 = vld [vmem:[%s1 + $0x468] sm:$0xff]
  %v168 = vld [vmem:[%s1 + $0x470] sm:$0xff]
  %v169 = vld [vmem:[%s1 + $0x478] sm:$0xff]
  %v170 = vld [vmem:[%s1 + $0x480] sm:$0xff]
  %v171 = vld [vmem:[%s1 + $0x488] sm:$0xff]
  %v172 = vld [vmem:[%s1 + $0x490] sm:$0xff]
  %v173 = vld [vmem:[%s1 + $0x498] sm:$0xff]
  %v174 = vld [vmem:[%s1 + $0x4a0] sm:$0xff]
  %v175 = vld [vmem:[%s1 + $0x4a8] sm:$0xff]
  %v176 = vld [vmem:[%s1 + $0x4b0] sm:$0xff]
  %v177 = vld [vmem:[%s1 + $0x4b8] sm:$0xff]
  %v178 = vld [vmem:[%s1 + $0x4c0] sm:$0xff]
  %v179 = vld [vmem:[%s1 + $0x4c8] sm:$0xff]
  %v180 = vld [vmem:[%s1 + $0x4d0] sm:$0xff]
  %v181 = vld [vmem:[%s1 + $0x4d8] sm:$0xff]
  %v182 = vld [vmem:[%s1 + $0x4e0] sm:$0xff]
  %v183 = vld [vmem:[%s1 + $0x4e8] sm:$0xff]
  %v184 = vld [vmem:[%s1 + $0x4f0] sm:$0xff]
  %v185 = vld [vmem:[%s1 + $0x4f8] sm:$0xff]
  %v186 = vld [vmem:[%s1 + $0x500] sm:$0xff]
  %v187 = vld [vmem:[%s1 + $0x508] sm:$0xff]
  %v188 = vld [vmem:[%s1 + $0x510] sm:$0xff]
  %v189 = vld [vmem:[%s1 + $0x518] sm:$0xff]
  %v190 = vld [vmem:[%s1 + $0x520] sm:$0xff]
  %v191 = vld [vmem:[%s1 + $0x528] sm:$0xff]
  %v192 = vld [vmem:[%s1 + $0x530] sm:$0xff]
  %v193 = vld [vmem:[%s1 + $0x538] sm:$0xff]
  %v194 = vld [vmem:[%s1 + $0x540] sm:$0xff]
  %v195 = vld [vmem:[%s1 + $0x548] sm:$0xff]
  %v196 = vld [vmem:[%s1 + $0x550] sm:$0xff]
  %v197 = vld [vmem:[%s1 + $0x558] sm:$0xff]
  %v198 = vld [vmem:[%s1 + $0x560] sm:$0xff]
  %v199 = vld [vmem:[%s1 + $0x568] sm:$0xff]
  %v200 = vld [vmem:[%s1 + $0x570] sm:$0xff]
  %v201 = vld [vmem:[%s1 + $0x578] sm:$0xff]
  %v202 = vld [vmem:[%s1 + $0x580] sm:$0xff]
  %v203 = vld [vmem:[%s1 + $0x588] sm:$0xff]
  %v204 = vld [vmem:[%s1 + $0x590] sm:$0xff]
  %v205 = vld [vmem:[%s1 + $0x598] sm:$0xff]
  %v206 = vld [vmem:[%s1 + $0x5a0] sm:$0xff]
  %v207 = vld [vmem:[%s1 + $0x5a8] sm:$0xff]
  %v208 = vld [vmem:[%s1 + $0x5b0] sm:$0xff]
  %v209 = vld [vmem:[%s1 + $0x5b8] sm:$0xff]
  %v210 = vld [vmem:[%s1 + $0x5c0] sm:$0xff]
  %v211 = vld [vmem:[%s1 + $0x5c8] sm:$0xff]
  %v212 = vld [vmem:[%s1 + $0x5d0] sm:$0xff]
  %v213 = vld [vmem:[%s1 + $0x5d8] sm:$0xff]
  %v214 = vld [vmem:[%s1 + $0x5e0] sm:$0xff]
  %v215 = vld [vmem:[%s1 + $0x5e8] sm:$0xff]
  %v216 = vld [vmem:[%s1 + $0x5f0] sm:$0xff]
  %v217 = vld [vmem:[%s1 + $0x5f8] sm:$0xff]
  %v218 = vld [vmem:[%s1 + $0x600] sm:$0xff]
  %v219 = vld [vmem:[%s1 + $0x608] sm:$0xff]
  %v220 = vld [vmem:[%s1 + $0x610] sm:$0xff]
  %v221 = vld [vmem:[%s1 + $0x618] sm:$0xff]
  %v222 = vld [vmem:[%s1 + $0x620] sm:$0xff]
  %v223 = vld [vmem:[%s1 + $0x628] sm:$0xff]
  %v224 = vld [vmem:[%s1 + $0x630] sm:$0xff]
  %v225 = vld [vmem:[%s1 + $0x638] sm:$0xff]
  %v226 = vld [vmem:[%s1 + $0x640] sm:$0xff]
  %v227 = vld [vmem:[%s1 + $0x648] sm:$0xff]
  %v228 = vld [vmem:[%s1 + $0x650] sm:$0xff]
  %v229 = vld [vmem:[%s1 + $0x658] sm:$0xff]
  %v230 = vld [vmem:[%s1 + $0x660] sm:$0xff]
  %v231 = vld [vmem:[%s1 + $0x668] sm:$0xff]
  %v232 = vld [vmem:[%s1 + $0x670] sm:$0xff]
  %v233 = vld [vmem:[%s1 + $0x678] sm:$0xff]
  %v234 = vld [vmem:[%s1 + $0x680] sm:$0xff]
  %v235 = vld [vmem:[%s1 + $0x688] sm:$0xff]
  %v236 = vld [vmem:[%s1 + $0x690] sm:$0xff]
  %v237 = vld [vmem:[%s1 + $0x698] sm:$0xff]
  %v238 = vld [vmem:[%s1 + $0x6a0] sm:$0xff]
  %v239 = vld [vmem:[%s1 + $0x6a8] sm:$0xff]
  %v240 = vld [vmem:[%s1 + $0x6b0] sm:$0xff]
  %v241 = vld [vmem:[%s1 + $0x6b8] sm:$0xff]
  %v242 = vld [vmem:[%s1 + $0x6c0] sm:$0xff]
  %v243 = vld [vmem:[%s1 + $0x6c8] sm:$0xff]
  %v244 = vld [vmem:[%s1 + $0x6d0] sm:$0xff]
  %v245 = vld [vmem:[%s1 + $0x6d8] sm:$0xff]
  %v246 = vld [vmem:[%s1 + $0x6e0] sm:$0xff]
  %v247 = vld [vmem:[%s1 + $0x6e8] sm:$0xff]
  %v248 = vld [vmem:[%s1 + $0x6f0] sm:$0xff]
  %v249 = vld [vmem:[%s1 + $0x6f8] sm:$0xff]
  %v250 = vld [vmem:[%s1 + $0x700] sm:$0xff]
  %v251 = vld [vmem:[%s1 + $0x708] sm:$0xff]
  %v252 = vld [vmem:[%s1 + $0x710] sm:$0xff]
  %v253 = vld [vmem:[%s1 + $0x718] sm:$0xff]
  %v254 = vld [vmem:[%s1 + $0x720] sm:$0xff]
  %v255 = vld [vmem:[%s1 + $0x728] sm:$0xff]
  %v256 = vld [vmem:[%s1 + $0x730] sm:$0xff]
  %v257 = vld [vmem:[%s1 + $0x738] sm:$0xff]
  %v258 = vld [vmem:[%s1 + $0x740] sm:$0xff]
  %v259 = vld [vmem:[%s1 + $0x748] sm:$0xff]
  %v260 = vld [vmem:[%s1 + $0x750] sm:$0xff]
  %v261 = vld [vmem:[%s1 + $0x758] sm:$0xff]
  %v262 = vld [vmem:[%s1 + $0x760] sm:$0xff]
  %v263 = vld [vmem:[%s1 + $0x768] sm:$0xff]
  %v264 = vld [vmem:[%s1 + $0x770] sm:$0xff]
  %v265 = vld [vmem:[%s1 + $0x778] sm:$0xff]
  %v266 = vld [vmem:[%s1 + $0x780] sm:$0xff]
  %v267 = vld [vmem:[%s1 + $0x788] sm:$0xff]
  %v268 = vld [vmem:[%s1 + $0x790] sm:$0xff]
  %v269 = vld [vmem:[%s1 + $0x798] sm:$0xff]
  %v270 = vld [vmem:[%s1 + $0x7a0] sm:$0xff]
  %v271 = vld [vmem:[%s1 + $0x7a8] sm:$0xff]
  %v272 = vld [vmem:[%s1 + $0x7b0] sm:$0xff]
  %v273 = vld [vmem:[%s1 + $0x7b8] sm:$0xff]
  %v274 = vld [vmem:[%s1 + $0x7c0] sm:$0xff]
  %v275 = vld [vmem:[%s1 + $0x7c8] sm:$0xff]
  %v276 = vld [vmem:[%s1 + $0x7d0] sm:$0xff]
  %v277 = vld [vmem:[%s1 + $0x7d8] sm:$0xff]
  %v278 = vld [vmem:[%s1 + $0x7e0] sm:$0xff]
  %v279 = vld [vmem:[%s1 + $0x7e8] sm:$0xff]
  %v280 = vld [vmem:[%s1 + $0x7f0] sm:$0xff]
  %v281 = vld [vmem:[%s1 + $0x7f8] sm:$0xff]
  %v282 = vld [vmem:[%s1 + $0x800] sm:$0xff]
  %v283 = vld [vmem:[%s1 + $0x808] sm:$0xff]
  %v284 = vld [vmem:[%s1 + $0x810] sm:$0xff]
  %v285 = vld [vmem:[%s1 + $0x818] sm:$0xff]
  %v286 = vld [vmem:[%s1 + $0x820] sm:$0xff]
  %v287 = vld [vmem:[%s1 + $0x828] sm:$0xff]
  %v288 = vld [vmem:[%s1 + $0x830] sm:$0xff]
  %v289 = vld [vmem:[%s1 + $0x838] sm:$0xff]
  %v290 = vld [vmem:[%s1 + $0x840] sm:$0xff]
  %v291 = vld [vmem:[%s1 + $0x848] sm:$0xff]
  %v292 = vld [vmem:[%s1 + $0x850] sm:$0xff]
  %v293 = vld [vmem:[%s1 + $0x858] sm:$0xff]
  %v294 = vld [vmem:[%s1 + $0x860] sm:$0xff]
  %v295 = vld [vmem:[%s1 + $0x868] sm:$0xff]
  %v296 = vld [vmem:[%s1 + $0x870] sm:$0xff]
  %v297 = vld [vmem:[%s1 + $0x878] sm:$0xff]
  %v298 = vld [vmem:[%s1 + $0x880] sm:$0xff]
  %v299 = vld [vmem:[%s1 + $0x888] sm:$0xff]
  %v300 = vld [vmem:[%s1 + $0x890] sm:$0xff]
  %v301 = vld [vmem:[%s1 + $0x898] sm:$0xff]
  %v302 = vld [vmem:[%s1 + $0x8a0] sm:$0xff]
  %v303 = vld [vmem:[%s1 + $0x8a8] sm:$0xff]
  %v304 = vld [vmem:[%s1 + $0x8b0] sm:$0xff]
  %v305 = vld [vmem:[%s1 + $0x8b8] sm:$0xff]
  %v306 = vld [vmem:[%s1 + $0x8c0] sm:$0xff]
  %v307 = vld [vmem:[%s1 + $0x8c8] sm:$0xff]
  %v308 = vld [vmem:[%s1 + $0x8d0] sm:$0xff]
  %v309 = vld [vmem:[%s1 + $0x8d8] sm:$0xff]
  %v310 = vld [vmem:[%s1 + $0x8e0] sm:$0xff]
  %v311 = vld [vmem:[%s1 + $0x8e8] sm:$0xff]
  %v312 = vld [vmem:[%s1 + $0x8f0] sm:$0xff]
  %v313 = vld [vmem:[%s1 + $0x8f8] sm:$0xff]
  %v314 = vld [vmem:[%s2] sm:$0x7]
  %v316 = vlaneseq
  %v317 = vshrl.u32 %v316, 7
  %v318 = vsub.s32 0, %v317
  %v319 = vrot.slane %v314, %v318
  %v320 = vlaneseq
  %v321 = vshrl.u32 %v320, 7
  %v322 = vsub.s32 1, %v321
  %v323 = vrot.slane %v314, %v322
  %v324 = vlaneseq
  %v325 = vshrl.u32 %v324, 7
  %v326 = vsub.s32 2, %v325
  %v327 = vrot.slane %v314, %v326
  %331 = vmatprep.subr.mxu0 %v27
  %332 = vmatpush1.msra.mxu0 %v26
  %333 = vmatprep.subr.mxu0 %v30
  %334 = vmatpush1.msra.mxu0 %v29
  %335 = vmatprep.subr.mxu0 %v33
  %336 = vmatpush1.msra.mxu0 %v32
  %337 = vmatprep.subr.mxu0 %v36
  %338 = vmatpush1.msra.mxu0 %v35
  %339 = vmatprep.subr.mxu0 %v39
  %340 = vmatpush1.msra.mxu0 %v38
  %341 = vmatprep.subr.mxu0 %v42
  %342 = vmatpush1.msra.mxu0 %v41
  %343 = vmatprep.subr.mxu0 %v45
  %344 = vmatpush1.msra.mxu0 %v44
  %345 = vmatprep.subr.mxu0 %v48
  %346 = vmatpush1.msra.mxu0 %v47
  %347 = vmatprep.subr.mxu0 %v51
  %348 = vmatpush1.msra.mxu0 %v50
  %349 = vmatprep.subr.mxu0 %v54
  %350 = vmatpush1.msra.mxu0 %v53
  %351 = vmatprep.subr.mxu0 %v57
  %352 = vmatpush1.msra.mxu0 %v56
  %353 = vmatprep.subr.mxu0 %v60
  %354 = vmatpush1.msra.mxu0 %v59
  %355 = vmatprep.subr.mxu0 %v63
  %356 = vmatpush1.msra.mxu0 %v62
  %357 = vmatprep.subr.mxu0 %v66
  %358 = vmatpush1.msra.mxu0 %v65
  %359 = vmatprep.subr.mxu0 %v69
  %360 = vmatpush1.msra.mxu0 %v68
  %361 = vmatprep.subr.mxu0 %v72
  %362 = vmatpush1.msra.mxu0 %v71
  %363 = vmatprep.subr.mxu0 %v75
  %364 = vmatpush1.msra.mxu0 %v74
  %365 = vmatprep.subr.mxu0 %v78
  %366 = vmatpush1.msra.mxu0 %v77
  %367 = vmatprep.subr.mxu0 %v81
  %368 = vmatpush1.msra.mxu0 %v80
  %369 = vmatprep.subr.mxu0 %v84
  %370 = vmatpush1.msra.mxu0 %v83
  %371 = vmatprep.subr.mxu0 %v87
  %372 = vmatpush1.msra.mxu0 %v86
  %373 = vmatprep.subr.mxu0 %v90
  %374 = vmatpush1.msra.mxu0 %v89
  %375 = vmatprep.subr.mxu0 %v93
  %376 = vmatpush1.msra.mxu0 %v92
  %377 = vmatprep.subr.mxu0 %v96
  %378 = vmatpush1.msra.mxu0 %v95
  %379 = vmatprep.subr.mxu0 %v99
  %380 = vmatpush1.msra.mxu0 %v98
  %381 = vmatprep.subr.mxu0 %v102
  %382 = vmatpush1.msra.mxu0 %v101
  %383 = vmatprep.subr.mxu0 %v105
  %384 = vmatpush1.msra.mxu0 %v104
  %385 = vmatprep.subr.mxu0 %v108
  %386 = vmatpush1.msra.mxu0 %v107
  %387 = vmatprep.subr.mxu0 %v111
  %388 = vmatpush1.msra.mxu0 %v110
  %389 = vmatprep.subr.mxu0 %v114
  %390 = vmatpush1.msra.mxu0 %v113
  %391 = vmatprep.subr.mxu0 %v117
  %392 = vmatpush1.msra.mxu0 %v116
  %393 = vmatprep.subr.mxu0 %v120
  %394 = vmatpush1.msra.mxu0 %v119
  %395 = vmatprep.mubr.f32.mxu0 %v21
  %396 = vmatmul.mubr.f32.gmra.mrb[0].mxu0 %v20
  %v397 = vpop.f32.mrb[0].mxu0
  %v398 = vadd.f32 %v319, %v397
  %v399 = vpop.f32.mrb[0].mxu0
  %v400 = vadd.f32 %v323, %v399
  %401 = vdwg.mxu0
  %402 = vmatprep.subr.mxu0 %v123
  %403 = vmatpush1.msra.mxu0 %v122
  %404 = vmatprep.subr.mxu0 %v126
  %405 = vmatpush1.msra.mxu0 %v125
  %406 = vmatprep.subr.mxu0 %v129
  %407 = vmatpush1.msra.mxu0 %v128
  %408 = vmatprep.subr.mxu0 %v132
  %409 = vmatpush1.msra.mxu0 %v131
  %410 = vmatprep.subr.mxu0 %v135
  %411 = vmatpush1.msra.mxu0 %v134
  %412 = vmatprep.subr.mxu0 %v138
  %413 = vmatpush1.msra.mxu0 %v137
  %414 = vmatprep.subr.mxu0 %v141
  %415 = vmatpush1.msra.mxu0 %v140
  %416 = vmatprep.subr.mxu0 %v144
  %417 = vmatpush1.msra.mxu0 %v143
  %418 = vmatprep.subr.mxu0 %v147
  %419 = vmatpush1.msra.mxu0 %v146
  %420 = vmatprep.subr.mxu0 %v150
  %421 = vmatpush1.msra.mxu0 %v149
  %422 = vmatprep.subr.mxu0 %v153
  %423 = vmatpush1.msra.mxu0 %v152
  %424 = vmatprep.subr.mxu0 %v156
  %425 = vmatpush1.msra.mxu0 %v155
  %426 = vmatprep.subr.mxu0 %v159
  %427 = vmatpush1.msra.mxu0 %v158
  %428 = vmatprep.subr.mxu0 %v162
  %429 = vmatpush1.msra.mxu0 %v161
  %430 = vmatprep.subr.mxu0 %v165
  %431 = vmatpush1.msra.mxu0 %v164
  %432 = vmatprep.subr.mxu0 %v168
  %433 = vmatpush1.msra.mxu0 %v167
  %434 = vmatprep.subr.mxu0 %v171
  %435 = vmatpush1.msra.mxu0 %v170
  %436 = vmatprep.subr.mxu0 %v174
  %437 = vmatpush1.msra.mxu0 %v173
  %438 = vmatprep.subr.mxu0 %v177
  %439 = vmatpush1.msra.mxu0 %v176
  %440 = vmatprep.subr.mxu0 %v180
  %441 = vmatpush1.msra.mxu0 %v179
  %442 = vmatprep.subr.mxu0 %v183
  %443 = vmatpush1.msra.mxu0 %v182
  %444 = vmatprep.subr.mxu0 %v186
  %445 = vmatpush1.msra.mxu0 %v185
  %446 = vmatprep.subr.mxu0 %v189
  %447 = vmatpush1.msra.mxu0 %v188
  %448 = vmatprep.subr.mxu0 %v192
  %449 = vmatpush1.msra.mxu0 %v191
  %450 = vmatprep.subr.mxu0 %v195
  %451 = vmatpush1.msra.mxu0 %v194
  %452 = vmatprep.subr.mxu0 %v198
  %453 = vmatpush1.msra.mxu0 %v197
  %454 = vmatprep.subr.mxu0 %v201
  %455 = vmatpush1.msra.mxu0 %v200
  %456 = vmatprep.subr.mxu0 %v204
  %457 = vmatpush1.msra.mxu0 %v203
  %458 = vmatprep.subr.mxu0 %v207
  %459 = vmatpush1.msra.mxu0 %v206
  %460 = vmatprep.subr.mxu0 %v210
  %461 = vmatpush1.msra.mxu0 %v209
  %462 = vmatprep.subr.mxu0 %v213
  %463 = vmatpush1.msra.mxu0 %v212
  %464 = vmatprep.subr.mxu0 %v216
  %465 = vmatpush1.msra.mxu0 %v215
  %466 = vmatprep.mubr.f32.mxu0 %v23
  %467 = vmatmul.mubr.f32.gmra.mrb[0].mxu0 %v22
  %v468 = vpop.f32.mrb[0].mxu0
  %v469 = vadd.f32 %v398, %v468
  %v470 = vpop.f32.mrb[0].mxu0
  %v471 = vadd.f32 %v400, %v470
  %472 = vdwg.mxu0
  %473 = vmatprep.subr.mxu0 %v219
  %474 = vmatpush1.msra.mxu0 %v218
  %475 = vmatprep.subr.mxu0 %v222
  %476 = vmatpush1.msra.mxu0 %v221
  %477 = vmatprep.subr.mxu0 %v225
  %478 = vmatpush1.msra.mxu0 %v224
  %479 = vmatprep.subr.mxu0 %v228
  %480 = vmatpush1.msra.mxu0 %v227
  %481 = vmatprep.subr.mxu0 %v231
  %482 = vmatpush1.msra.mxu0 %v230
  %483 = vmatprep.subr.mxu0 %v234
  %484 = vmatpush1.msra.mxu0 %v233
  %485 = vmatprep.subr.mxu0 %v237
  %486 = vmatpush1.msra.mxu0 %v236
  %487 = vmatprep.subr.mxu0 %v240
  %488 = vmatpush1.msra.mxu0 %v239
  %489 = vmatprep.subr.mxu0 %v243
  %490 = vmatpush1.msra.mxu0 %v242
  %491 = vmatprep.subr.mxu0 %v246
  %492 = vmatpush1.msra.mxu0 %v245
  %493 = vmatprep.subr.mxu0 %v249
  %494 = vmatpush1.msra.mxu0 %v248
  %495 = vmatprep.subr.mxu0 %v252
  %496 = vmatpush1.msra.mxu0 %v251
  %497 = vmatprep.subr.mxu0 %v255
  %498 = vmatpush1.msra.mxu0 %v254
  %499 = vmatprep.subr.mxu0 %v258
  %500 = vmatpush1.msra.mxu0 %v257
  %501 = vmatprep.subr.mxu0 %v261
  %502 = vmatpush1.msra.mxu0 %v260
  %503 = vmatprep.subr.mxu0 %v264
  %504 = vmatpush1.msra.mxu0 %v263
  %505 = vmatprep.subr.mxu0 %v267
  %506 = vmatpush1.msra.mxu0 %v266
  %507 = vmatprep.subr.mxu0 %v270
  %508 = vmatpush1.msra.mxu0 %v269
  %509 = vmatprep.subr.mxu0 %v273
  %510 = vmatpush1.msra.mxu0 %v272
  %511 = vmatprep.subr.mxu0 %v276
  %512 = vmatpush1.msra.mxu0 %v275
  %513 = vmatprep.subr.mxu0 %v279
  %514 = vmatpush1.msra.mxu0 %v278
  %515 = vmatprep.subr.mxu0 %v282
  %516 = vmatpush1.msra.mxu0 %v281
  %517 = vmatprep.subr.mxu0 %v285
  %518 = vmatpush1.msra.mxu0 %v284
  %519 = vmatprep.subr.mxu0 %v288
  %520 = vmatpush1.msra.mxu0 %v287
  %521 = vmatprep.subr.mxu0 %v291
  %522 = vmatpush1.msra.mxu0 %v290
  %523 = vmatprep.subr.mxu0 %v294
  %524 = vmatpush1.msra.mxu0 %v293
  %525 = vmatprep.subr.mxu0 %v297
  %526 = vmatpush1.msra.mxu0 %v296
  %527 = vmatprep.subr.mxu0 %v300
  %528 = vmatpush1.msra.mxu0 %v299
  %529 = vmatprep.subr.mxu0 %v303
  %530 = vmatpush1.msra.mxu0 %v302
  %531 = vmatprep.subr.mxu0 %v306
  %532 = vmatpush1.msra.mxu0 %v305
  %533 = vmatprep.subr.mxu0 %v309
  %534 = vmatpush1.msra.mxu0 %v308
  %535 = vmatprep.subr.mxu0 %v312
  %536 = vmatpush1.msra.mxu0 %v311
  %537 = vmatprep.mubr.f32.mxu0 %v25
  %538 = vmatmul.mubr.f32.gmra.mrb[0].mxu0 %v24
  %v539 = vpop.f32.mrb[0].mxu0
  %v540 = vadd.f32 %v469, %v539
  %v541 = vpop.f32.mrb[0].mxu0
  %v542 = vadd.f32 %v471, %v541
  %543 = vdwg.mxu0
  %544 = vmatprep.subr.mxu0 0.0
  %545 = vmatpush1.msra.mxu0 %v28
  %546 = vmatprep.subr.mxu0 0.0
  %547 = vmatpush1.msra.mxu0 %v31
  %548 = vmatprep.subr.mxu0 0.0
  %549 = vmatpush1.msra.mxu0 %v34
  %550 = vmatprep.subr.mxu0 0.0
  %551 = vmatpush1.msra.mxu0 %v37
  %552 = vmatprep.subr.mxu0 0.0
  %553 = vmatpush1.msra.mxu0 %v40
  %554 = vmatprep.subr.mxu0 0.0
  %555 = vmatpush1.msra.mxu0 %v43
  %556 = vmatprep.subr.mxu0 0.0
  %557 = vmatpush1.msra.mxu0 %v46
  %558 = vmatprep.subr.mxu0 0.0
  %559 = vmatpush1.msra.mxu0 %v49
  %560 = vmatprep.subr.mxu0 0.0
  %561 = vmatpush1.msra.mxu0 %v52
  %562 = vmatprep.subr.mxu0 0.0
  %563 = vmatpush1.msra.mxu0 %v55
  %564 = vmatprep.subr.mxu0 0.0
  %565 = vmatpush1.msra.mxu0 %v58
  %566 = vmatprep.subr.mxu0 0.0
  %567 = vmatpush1.msra.mxu0 %v61
  %568 = vmatprep.subr.mxu0 0.0
  %569 = vmatpush1.msra.mxu0 %v64
  %570 = vmatprep.subr.mxu0 0.0
  %571 = vmatpush1.msra.mxu0 %v67
  %572 = vmatprep.subr.mxu0 0.0
  %573 = vmatpush1.msra.mxu0 %v70
  %574 = vmatprep.subr.mxu0 0.0
  %575 = vmatpush1.msra.mxu0 %v73
  %576 = vmatprep.subr.mxu0 0.0
  %577 = vmatpush1.msra.mxu0 %v76
  %578 = vmatprep.subr.mxu0 0.0
  %579 = vmatpush1.msra.mxu0 %v79
  %580 = vmatprep.subr.mxu0 0.0
  %581 = vmatpush1.msra.mxu0 %v82
  %582 = vmatprep.subr.mxu0 0.0
  %583 = vmatpush1.msra.mxu0 %v85
  %584 = vmatprep.subr.mxu0 0.0
  %585 = vmatpush1.msra.mxu0 %v88
  %586 = vmatprep.subr.mxu0 0.0
  %587 = vmatpush1.msra.mxu0 %v91
  %588 = vmatprep.subr.mxu0 0.0
  %589 = vmatpush1.msra.mxu0 %v94
  %590 = vmatprep.subr.mxu0 0.0
  %591 = vmatpush1.msra.mxu0 %v97
  %592 = vmatprep.subr.mxu0 0.0
  %593 = vmatpush1.msra.mxu0 %v100
  %594 = vmatprep.subr.mxu0 0.0
  %595 = vmatpush1.msra.mxu0 %v103
  %596 = vmatprep.subr.mxu0 0.0
  %597 = vmatpush1.msra.mxu0 %v106
  %598 = vmatprep.subr.mxu0 0.0
  %599 = vmatpush1.msra.mxu0 %v109
  %600 = vmatprep.subr.mxu0 0.0
  %601 = vmatpush1.msra.mxu0 %v112
  %602 = vmatprep.subr.mxu0 0.0
  %603 = vmatpush1.msra.mxu0 %v115
  %604 = vmatprep.subr.mxu0 0.0
  %605 = vmatpush1.msra.mxu0 %v118
  %606 = vmatprep.subr.mxu0 0.0
  %607 = vmatpush1.msra.mxu0 %v121
  %608 = vmatprep.mubr.f32.mxu0 %v21
  %609 = vmatmul.mubr.f32.gmra.mrb[0].mxu0 %v20
  %v610 = vpop.f32.mrb[0].mxu0
  %v611 = vadd.f32 %v327, %v610
  %v612 = vpop.f32.mrb[0].mxu0
  %613 = vdwg.mxu0
  %614 = vmatprep.subr.mxu0 0.0
  %615 = vmatpush1.msra.mxu0 %v124
  %616 = vmatprep.subr.mxu0 0.0
  %617 = vmatpush1.msra.mxu0 %v127
  %618 = vmatprep.subr.mxu0 0.0
  %619 = vmatpush1.msra.mxu0 %v130
  %620 = vmatprep.subr.mxu0 0.0
  %621 = vmatpush1.msra.mxu0 %v133
  %622 = vmatprep.subr.mxu0 0.0
  %623 = vmatpush1.msra.mxu0 %v136
  %624 = vmatprep.subr.mxu0 0.0
  %625 = vmatpush1.msra.mxu0 %v139
  %626 = vmatprep.subr.mxu0 0.0
  %627 = vmatpush1.msra.mxu0 %v142
  %628 = vmatprep.subr.mxu0 0.0
  %629 = vmatpush1.msra.mxu0 %v145
  %630 = vmatprep.subr.mxu0 0.0
  %631 = vmatpush1.msra.mxu0 %v148
  %632 = vmatprep.subr.mxu0 0.0
  %633 = vmatpush1.msra.mxu0 %v151
  %634 = vmatprep.subr.mxu0 0.0
  %635 = vmatpush1.msra.mxu0 %v154
  %636 = vmatprep.subr.mxu0 0.0
  %637 = vmatpush1.msra.mxu0 %v157
  %638 = vmatprep.subr.mxu0 0.0
  %639 = vmatpush1.msra.mxu0 %v160
  %640 = vmatprep.subr.mxu0 0.0
  %641 = vmatpush1.msra.mxu0 %v163
  %642 = vmatprep.subr.mxu0 0.0
  %643 = vmatpush1.msra.mxu0 %v166
  %644 = vmatprep.subr.mxu0 0.0
  %645 = vmatpush1.msra.mxu0 %v169
  %646 = vmatprep.subr.mxu0 0.0
  %647 = vmatpush1.msra.mxu0 %v172
  %648 = vmatprep.subr.mxu0 0.0
  %649 = vmatpush1.msra.mxu0 %v175
  %650 = vmatprep.subr.mxu0 0.0
  %651 = vmatpush1.msra.mxu0 %v178
  %652 = vmatprep.subr.mxu0 0.0
  %653 = vmatpush1.msra.mxu0 %v181
  %654 = vmatprep.subr.mxu0 0.0
  %655 = vmatpush1.msra.mxu0 %v184
  %656 = vmatprep.subr.mxu0 0.0
  %657 = vmatpush1.msra.mxu0 %v187
  %658 = vmatprep.subr.mxu0 0.0
  %659 = vmatpush1.msra.mxu0 %v190
  %660 = vmatprep.subr.mxu0 0.0
  %661 = vmatpush1.msra.mxu0 %v193
  %662 = vmatprep.subr.mxu0 0.0
  %663 = vmatpush1.msra.mxu0 %v196
  %664 = vmatprep.subr.mxu0 0.0
  %665 = vmatpush1.msra.mxu0 %v199
  %666 = vmatprep.subr.mxu0 0.0
  %667 = vmatpush1.msra.mxu0 %v202
  %668 = vmatprep.subr.mxu0 0.0
  %669 = vmatpush1.msra.mxu0 %v205
  %670 = vmatprep.subr.mxu0 0.0
  %671 = vmatpush1.msra.mxu0 %v208
  %672 = vmatprep.subr.mxu0 0.0
  %673 = vmatpush1.msra.mxu0 %v211
  %674 = vmatprep.subr.mxu0 0.0
  %675 = vmatpush1.msra.mxu0 %v214
  %676 = vmatprep.subr.mxu0 0.0
  %677 = vmatpush1.msra.mxu0 %v217
  %678 = vmatprep.mubr.f32.mxu0 %v23
  %679 = vmatmul.mubr.f32.gmra.mrb[0].mxu0 %v22
  %v680 = vpop.f32.mrb[0].mxu0
  %v681 = vadd.f32 %v611, %v680
  %v682 = vpop.f32.mrb[0].mxu0
  %683 = vdwg.mxu0
  %684 = vmatprep.subr.mxu0 0.0
  %685 = vmatpush1.msra.mxu0 %v220
  %686 = vmatprep.subr.mxu0 0.0
  %687 = vmatpush1.msra.mxu0 %v223
  %688 = vmatprep.subr.mxu0 0.0
  %689 = vmatpush1.msra.mxu0 %v226
  %690 = vmatprep.subr.mxu0 0.0
  %691 = vmatpush1.msra.mxu0 %v229
  %692 = vmatprep.subr.mxu0 0.0
  %693 = vmatpush1.msra.mxu0 %v232
  %694 = vmatprep.subr.mxu0 0.0
  %695 = vmatpush1.msra.mxu0 %v235
  %696 = vmatprep.subr.mxu0 0.0
  %697 = vmatpush1.msra.mxu0 %v238
  %698 = vmatprep.subr.mxu0 0.0
  %699 = vmatpush1.msra.mxu0 %v241
  %700 = vmatprep.subr.mxu0 0.0
  %701 = vmatpush1.msra.mxu0 %v244
  %702 = vmatprep.subr.mxu0 0.0
  %703 = vmatpush1.msra.mxu0 %v247
  %704 = vmatprep.subr.mxu0 0.0
  %705 = vmatpush1.msra.mxu0 %v250
  %706 = vmatprep.subr.mxu0 0.0
  %707 = vmatpush1.msra.mxu0 %v253
  %708 = vmatprep.subr.mxu0 0.0
  %709 = vmatpush1.msra.mxu0 %v256
  %710 = vmatprep.subr.mxu0 0.0
  %711 = vmatpush1.msra.mxu0 %v259
  %712 = vmatprep.subr.mxu0 0.0
  %713 = vmatpush1.msra.mxu0 %v262
  %714 = vmatprep.subr.mxu0 0.0
  %715 = vmatpush1.msra.mxu0 %v265
  %716 = vmatprep.subr.mxu0 0.0
  %717 = vmatpush1.msra.mxu0 %v268
  %718 = vmatprep.subr.mxu0 0.0
  %719 = vmatpush1.msra.mxu0 %v271
  %720 = vmatprep.subr.mxu0 0.0
  %721 = vmatpush1.msra.mxu0 %v274
  %722 = vmatprep.subr.mxu0 0.0
  %723 = vmatpush1.msra.mxu0 %v277
  %724 = vmatprep.subr.mxu0 0.0
  %725 = vmatpush1.msra.mxu0 %v280
  %726 = vmatprep.subr.mxu0 0.0
  %727 = vmatpush1.msra.mxu0 %v283
  %728 = vmatprep.subr.mxu0 0.0
  %729 = vmatpush1.msra.mxu0 %v286
  %730 = vmatprep.subr.mxu0 0.0
  %731 = vmatpush1.msra.mxu0 %v289
  %732 = vmatprep.subr.mxu0 0.0
  %733 = vmatpush1.msra.mxu0 %v292
  %734 = vmatprep.subr.mxu0 0.0
  %735 = vmatpush1.msra.mxu0 %v295
  %736 = vmatprep.subr.mxu0 0.0
  %737 = vmatpush1.msra.mxu0 %v298
  %738 = vmatprep.subr.mxu0 0.0
  %739 = vmatpush1.msra.mxu0 %v301
  %740 = vmatprep.subr.mxu0 0.0
  %741 = vmatpush1.msra.mxu0 %v304
  %742 = vmatprep.subr.mxu0 0.0
  %743 = vmatpush1.msra.mxu0 %v307
  %744 = vmatprep.subr.mxu0 0.0
  %745 = vmatpush1.msra.mxu0 %v310
  %746 = vmatprep.subr.mxu0 0.0
  %747 = vmatpush1.msra.mxu0 %v313
  %748 = vmatprep.mubr.f32.mxu0 %v25
  %749 = vmatmul.mubr.f32.gmra.mrb[0].mxu0 %v24
  %v750 = vpop.f32.mrb[0].mxu0
  %v751 = vadd.f32 %v681, %v750
  %v752 = vpop.f32.mrb[0].mxu0
  %753 = vdwg.mxu0
  %v754 = vmax.f32 %v540, 0.0
  %v755 = vmax.f32 %v542, 0.0
  %v756 = vmax.f32 %v751, 0.0
  %v757 = vld [vmem:[%s3] sm:$0xff]
  %v758 = vld [vmem:[%s3 + $0x8] sm:$0xff]
  %v759 = vld [vmem:[%s3 + $0x10] sm:$0xff]
  %v760 = vld [vmem:[%s3 + $0x18] sm:$0xff]
  %v761 = vld [vmem:[%s3 + $0x20] sm:$0xff]
  %v762 = vld [vmem:[%s3 + $0x28] sm:$0xff]
  %v763 = vld [vmem:[%s3 + $0x30] sm:$0xff]
  %v764 = vld [vmem:[%s3 + $0x38] sm:$0xff]
  %v765 = vld [vmem:[%s3 + $0x40] sm:$0xff]
  %v766 = vld [vmem:[%s3 + $0x48] sm:$0xff]
  %v767 = vld [vmem:[%s3 + $0x50] sm:$0xff]
  %v768 = vld [vmem:[%s3 + $0x58] sm:$0xff]
  %v769 = vld [vmem:[%s3 + $0x60] sm:$0xff]
  %v770 = vld [vmem:[%s3 + $0x68] sm:$0xff]
  %v771 = vld [vmem:[%s3 + $0x70] sm:$0xff]
  %v772 = vld [vmem:[%s3 + $0x78] sm:$0xff]
  %v773 = vld [vmem:[%s3 + $0x80] sm:$0xff]
  %v774 = vld [vmem:[%s3 + $0x88] sm:$0xff]
  %v775 = vld [vmem:[%s3 + $0x90] sm:$0xff]
  %v776 = vld [vmem:[%s3 + $0x98] sm:$0xff]
  %v777 = vld [vmem:[%s3 + $0xa0] sm:$0xff]
  %v778 = vld [vmem:[%s3 + $0xa8] sm:$0xff]
  %v779 = vld [vmem:[%s3 + $0xb0] sm:$0xff]
  %v780 = vld [vmem:[%s3 + $0xb8] sm:$0xff]
  %v781 = vld [vmem:[%s3 + $0xc0] sm:$0xff]
  %v782 = vld [vmem:[%s3 + $0xc8] sm:$0xff]
  %v783 = vld [vmem:[%s3 + $0xd0] sm:$0xff]
  %v784 = vld [vmem:[%s3 + $0xd8] sm:$0xff]
  %v785 = vld [vmem:[%s3 + $0xe0] sm:$0xff]
  %v786 = vld [vmem:[%s3 + $0xe8] sm:$0xff]
  %v787 = vld [vmem:[%s3 + $0xf0] sm:$0xff]
  %v788 = vld [vmem:[%s3 + $0xf8] sm:$0xff]
  %v789 = vld [vmem:[%s3 + $0x100] sm:$0xff]
  %v790 = vld [vmem:[%s3 + $0x108] sm:$0xff]
  %v791 = vld [vmem:[%s3 + $0x110] sm:$0xff]
  %v792 = vld [vmem:[%s3 + $0x118] sm:$0xff]
  %v793 = vld [vmem:[%s3 + $0x120] sm:$0xff]
  %v794 = vld [vmem:[%s3 + $0x128] sm:$0xff]
  %v795 = vld [vmem:[%s3 + $0x130] sm:$0xff]
  %v796 = vld [vmem:[%s3 + $0x138] sm:$0xff]
  %v797 = vld [vmem:[%s3 + $0x140] sm:$0xff]
  %v798 = vld [vmem:[%s3 + $0x148] sm:$0xff]
  %v799 = vld [vmem:[%s3 + $0x150] sm:$0xff]
  %v800 = vld [vmem:[%s3 + $0x158] sm:$0xff]
  %v801 = vld [vmem:[%s3 + $0x160] sm:$0xff]
  %v802 = vld [vmem:[%s3 + $0x168] sm:$0xff]
  %v803 = vld [vmem:[%s3 + $0x170] sm:$0xff]
  %v804 = vld [vmem:[%s3 + $0x178] sm:$0xff]
  %v805 = vld [vmem:[%s4] sm:$0x1]
  %v807 = vlaneseq
  %v808 = vshrl.u32 %v807, 7
  %v809 = vsub.s32 0, %v808
  %v810 = vrot.slane %v805, %v809
  %812 = vmatprep.subr.mxu0 0.0
  %813 = vmatpush1.msra.mxu0 %v757
  %814 = vmatprep.subr.mxu0 0.0
  %815 = vmatpush1.msra.mxu0 %v758
  %816 = vmatprep.subr.mxu0 0.0
  %817 = vmatpush1.msra.mxu0 %v759
  %818 = vmatprep.subr.mxu0 0.0
  %819 = vmatpush1.msra.mxu0 %v760
  %820 = vmatprep.subr.mxu0 0.0
  %821 = vmatpush1.msra.mxu0 %v761
  %822 = vmatprep.subr.mxu0 0.0
  %823 = vmatpush1.msra.mxu0 %v762
  %824 = vmatprep.subr.mxu0 0.0
  %825 = vmatpush1.msra.mxu0 %v763
  %826 = vmatprep.subr.mxu0 0.0
  %827 = vmatpush1.msra.mxu0 %v764
  %828 = vmatprep.subr.mxu0 0.0
  %829 = vmatpush1.msra.mxu0 %v765
  %830 = vmatprep.subr.mxu0 0.0
  %831 = vmatpush1.msra.mxu0 %v766
  %832 = vmatprep.subr.mxu0 0.0
  %833 = vmatpush1.msra.mxu0 %v767
  %834 = vmatprep.subr.mxu0 0.0
  %835 = vmatpush1.msra.mxu0 %v768
  %836 = vmatprep.subr.mxu0 0.0
  %837 = vmatpush1.msra.mxu0 %v769
  %838 = vmatprep.subr.mxu0 0.0
  %839 = vmatpush1.msra.mxu0 %v770
  %840 = vmatprep.subr.mxu0 0.0
  %841 = vmatpush1.msra.mxu0 %v771
  %842 = vmatprep.subr.mxu0 0.0
  %843 = vmatpush1.msra.mxu0 %v772
  %844 = vmatprep.subr.mxu0 0.0
  %845 = vmatpush1.msra.mxu0 %v773
  %846 = vmatprep.subr.mxu0 0.0
  %847 = vmatpush1.msra.mxu0 %v774
  %848 = vmatprep.subr.mxu0 0.0
  %849 = vmatpush1.msra.mxu0 %v775
  %850 = vmatprep.subr.mxu0 0.0
  %851 = vmatpush1.msra.mxu0 %v776
  %852 = vmatprep.subr.mxu0 0.0
  %853 = vmatpush1.msra.mxu0 %v777
  %854 = vmatprep.subr.mxu0 0.0
  %855 = vmatpush1.msra.mxu0 %v778
  %856 = vmatprep.subr.mxu0 0.0
  %857 = vmatpush1.msra.mxu0 %v779
  %858 = vmatprep.subr.mxu0 0.0
  %859 = vmatpush1.msra.mxu0 %v780
  %860 = vmatprep.subr.mxu0 0.0
  %861 = vmatpush1.msra.mxu0 %v781
  %862 = vmatprep.subr.mxu0 0.0
  %863 = vmatpush1.msra.mxu0 %v782
  %864 = vmatprep.subr.mxu0 0.0
  %865 = vmatpush1.msra.mxu0 %v783
  %866 = vmatprep.subr.mxu0 0.0
  %867 = vmatpush1.msra.mxu0 %v784
  %868 = vmatprep.subr.mxu0 0.0
  %869 = vmatpush1.msra.mxu0 %v785
  %870 = vmatprep.subr.mxu0 0.0
  %871 = vmatpush1.msra.mxu0 %v786
  %872 = vmatprep.subr.mxu0 0.0
  %873 = vmatpush1.msra.mxu0 %v787
  %874 = vmatprep.subr.mxu0 0.0
  %875 = vmatpush1.msra.mxu0 %v788
  %876 = vmatprep.mubr.f32.mxu0 %v755
  %877 = vmatmul.mubr.f32.gmra.mrb[0].mxu0 %v754
  %v878 = vpop.f32.mrb[0].mxu0
  %v879 = vadd.f32 %v810, %v878
  %v880 = vpop.f32.mrb[0].mxu0
  %881 = vdwg.mxu0
  %882 = vmatprep.subr.mxu0 0.0
  %883 = vmatpush1.msra.mxu0 %v789
  %884 = vmatprep.subr.mxu0 0.0
  %885 = vmatpush1.msra.mxu0 %v790
  %886 = vmatprep.subr.mxu0 0.0
  %887 = vmatpush1.msra.mxu0 %v791
  %888 = vmatprep.subr.mxu0 0.0
  %889 = vmatpush1.msra.mxu0 %v792
  %890 = vmatprep.subr.mxu0 0.0
  %891 = vmatpush1.msra.mxu0 %v793
  %892 = vmatprep.subr.mxu0 0.0
  %893 = vmatpush1.msra.mxu0 %v794
  %894 = vmatprep.subr.mxu0 0.0
  %895 = vmatpush1.msra.mxu0 %v795
  %896 = vmatprep.subr.mxu0 0.0
  %897 = vmatpush1.msra.mxu0 %v796
  %898 = vmatprep.subr.mxu0 0.0
  %899 = vmatpush1.msra.mxu0 %v797
  %900 = vmatprep.subr.mxu0 0.0
  %901 = vmatpush1.msra.mxu0 %v798
  %902 = vmatprep.subr.mxu0 0.0
  %903 = vmatpush1.msra.mxu0 %v799
  %904 = vmatprep.subr.mxu0 0.0
  %905 = vmatpush1.msra.mxu0 %v800
  %906 = vmatprep.subr.mxu0 0.0
  %907 = vmatpush1.msra.mxu0 %v801
  %908 = vmatprep.subr.mxu0 0.0
  %909 = vmatpush1.msra.mxu0 %v802
  %910 = vmatprep.subr.mxu0 0.0
  %911 = vmatpush1.msra.mxu0 %v803
  %912 = vmatprep.subr.mxu0 0.0
  %913 = vmatpush1.msra.mxu0 %v804
  %914 = vmatprep.subr.mxu0 0.0
  %915 = vmatpush1.msra.mxu0 0.0
  %916 = vmatprep.subr.mxu0 0.0
  %917 = vmatpush1.msra.mxu0 0.0
  %918 = vmatprep.subr.mxu0 0.0
  %919 = vmatpush1.msra.mxu0 0.0
  %920 = vmatprep.subr.mxu0 0.0
  %921 = vmatpush1.msra.mxu0 0.0
  %922 = vmatprep.subr.mxu0 0.0
  %923 = vmatpush1.msra.mxu0 0.0
  %924 = vmatprep.subr.mxu0 0.0
  %925 = vmatpush1.msra.mxu0 0.0
  %926 = vmatprep.subr.mxu0 0.0
  %927 = vmatpush1.msra.mxu0 0.0
  %928 = vmatprep.subr.mxu0 0.0
  %929 = vmatpush1.msra.mxu0 0.0
  %930 = vmatprep.subr.mxu0 0.0
  %931 = vmatpush1.msra.mxu0 0.0
  %932 = vmatprep.subr.mxu0 0.0
  %933 = vmatpush1.msra.mxu0 0.0
  %934 = vmatprep.subr.mxu0 0.0
  %935 = vmatpush1.msra.mxu0 0.0
  %936 = vmatprep.subr.mxu0 0.0
  %937 = vmatpush1.msra.mxu0 0.0
  %938 = vmatprep.subr.mxu0 0.0
  %939 = vmatpush1.msra.mxu0 0.0
  %940 = vmatprep.subr.mxu0 0.0
  %941 = vmatpush1.msra.mxu0 0.0
  %942 = vmatprep.subr.mxu0 0.0
  %943 = vmatpush1.msra.mxu0 0.0
  %944 = vmatprep.subr.mxu0 0.0
  %945 = vmatpush1.msra.mxu0 0.0
  %946 = vmatprep.mubr.f32.mxu0 0.0
  %947 = vmatmul.mubr.f32.gmra.mrb[0].mxu0 %v756
  %v948 = vpop.f32.mrb[0].mxu0
  %v949 = vadd.f32 %v879, %v948
  %v950 = vpop.f32.mrb[0].mxu0
  %951 = vdwg.mxu0
  %952 = vst [vmem:[%s5] sm:$0xff] %v949
  // Predicated region
  $region22: #{discriminator_forward.1} parent=0 // pred_check
    _
  $region23: #{discriminator_forward.1} parent=0 // pred_check_branch
    %954 = sbr.rel (0) target = $region25
  $region24: #{discriminator_forward.1} parent=0 // pred_region
    _
  $region25: #{discriminator_forward.1} parent=0 // pred_fallthru
    _
  // Predicated region
  $region26: #{discriminator_forward.1} parent=0 // pred_check
    _
  $region27: #{discriminator_forward.1} parent=0 // pred_check_branch
    %956 = sbr.rel (0) target = $region29
  $region28: #{discriminator_forward.1} parent=0 // pred_region
    _
  $region29: #{discriminator_forward.1} parent=0 // pred_fallthru
    _

</llo_original>
